<compile_context>
chip_gen: v5e
topology: v5e:2x2
jax: 0.10.0
libtpu: 0.0.40
codegen_flags: <defaults>
</compile_context>

<pallas_src>
import functools
import math

import jax
import jax.numpy as jnp
from jax.experimental import pallas as pl
from jax.experimental.pallas import tpu as pltpu


# ----------------------------------------------------------------------------
# small helpers
# ----------------------------------------------------------------------------
def _pair(v):
    return (v, v) if isinstance(v, int) else tuple(v)


def _round_up(x, m):
    return ((x + m - 1) // m) * m


def _make_divisible(v, divisor, min_value=None):
    if min_value is None:
        min_value = divisor
    new_v = max(min_value, int(v + divisor / 2) // divisor * divisor)
    if new_v < 0.9 * v:
        new_v += divisor
    return new_v


# ----------------------------------------------------------------------------
# Pallas kernels
# ----------------------------------------------------------------------------
def _mm_kernel(x_ref, w_ref, b_ref, o_ref, *, act):
    # x: (TM, K) bf16, w: (K, N) bf16 (BN scale folded in), b: (1, N) f32
    y = jnp.dot(x_ref[...], w_ref[...], preferred_element_type=jnp.float32)
    y = y + b_ref[...]
    if act == "relu":
        y = jnp.maximum(y, 0.0)
    o_ref[...] = y.astype(o_ref.dtype)


@functools.partial(jax.jit, static_argnames=("act",))
def matmul_bias_act(x, w, bias, act="none"):
    """out = act(x @ w + bias); x:(M,K) bf16, w:(K,N) bf16, bias:(1,N) f32 -> (M,N) bf16."""
    M, K = x.shape
    N = w.shape[1]
    tm = None
    for cand in (512, 256, 128):          # bigger row tiles amortize per-step overhead
        if M % cand == 0:
            tm = cand
            break
    Mp = M
    if tm is None:
        if M <= 512:
            tm = M                         # full-dim block (allowed regardless of 8/128 rule)
        else:
            tm = 128
            Mp = _round_up(M, 128)
            x = jnp.pad(x, ((0, Mp - M), (0, 0)))
    out = pl.pallas_call(
        functools.partial(_mm_kernel, act=act),
        out_shape=jax.ShapeDtypeStruct((Mp, N), jnp.bfloat16),
        grid=(Mp // tm,),
        in_specs=[
            pl.BlockSpec((tm, K), lambda i: (i, 0)),
            pl.BlockSpec((K, N), lambda i: (0, 0)),
            pl.BlockSpec((1, N), lambda i: (0, 0)),
        ],
        out_specs=pl.BlockSpec((tm, N), lambda i: (i, 0)),
        compiler_params=pltpu.CompilerParams(dimension_semantics=("parallel",)),
    )(x, w, bias)
    return out if Mp == M else out[:M]


def _dw_kernel(x_ref, w_ref, b_ref, o_ref, *, kh, kw, act):
    # x: (1, Hp, Wp, C) bf16 (already zero-padded spatially), w: (kh*kw, C) f32,
    # b: (1, C) f32, o: (1, Ho, Wo, C) bf16 (stride-1 valid conv over the padded input).
    x = x_ref[0].astype(jnp.float32)
    wv = w_ref[...]
    ho = o_ref.shape[1]
    wo = o_ref.shape[2]
    acc = None
    for i in range(kh):
        for j in range(kw):
            t = i * kw + j
            tap = x[i:i + ho, j:j + wo, :] * wv[t:t + 1][None]   # (ho, wo, C)
            acc = tap if acc is None else acc + tap
    y = acc + b_ref[...][None]
    if act == "relu":
        y = jnp.maximum(y, 0.0)
    o_ref[0] = y.astype(o_ref.dtype)


@functools.partial(jax.jit, static_argnames=("kh", "kw", "stride", "padding", "act"))
def _dwconv_impl(x, w, bias, *, kh, kw, stride, padding, act):
    """Depthwise conv (dilation=1): taps accumulated inside VMEM, one image per grid step."""
    N, H, W, C = x.shape
    ph, pw_ = padding
    xp = jnp.pad(x, ((0, 0), (ph, ph), (pw_, pw_), (0, 0)))
    Hp, Wp = H + 2 * ph, W + 2 * pw_
    Ho1, Wo1 = Hp - (kh - 1), Wp - (kw - 1)
    out = pl.pallas_call(
        functools.partial(_dw_kernel, kh=kh, kw=kw, act=act),
        out_shape=jax.ShapeDtypeStruct((N, Ho1, Wo1, C), jnp.bfloat16),
        grid=(N,),
        in_specs=[
            pl.BlockSpec((1, Hp, Wp, C), lambda n: (n, 0, 0, 0)),
            pl.BlockSpec((kh * kw, C), lambda n: (0, 0)),
            pl.BlockSpec((1, C), lambda n: (0, 0)),
        ],
        out_specs=pl.BlockSpec((1, Ho1, Wo1, C), lambda n: (n, 0, 0, 0)),
        compiler_params=pltpu.CompilerParams(dimension_semantics=("parallel",)),
    )(xp, w, bias)
    sh, sw = stride
    if sh > 1 or sw > 1:
        # stride handled by subsampling the stride-1 result (exact for dilation=1);
        # dw-conv FLOPs are negligible so the extra compute is free.
        out = out[:, ::sh, ::sw, :]
    return out


def _se_kernel(x_ref, w1_ref, b1_ref, w2_ref, b2_ref, o_ref):
    # Fused SqueezeExcite: global-avg-pool -> reduce(1x1)+ReLU -> expand(1x1)
    # -> hard_sigmoid -> gate multiply, all in VMEM.
    x = x_ref[0].astype(jnp.float32)                               # (H, W, C)
    c = x.shape[-1]
    pooled = jnp.mean(x, axis=(0, 1), keepdims=True).reshape(1, c)  # (1, C)
    h = jnp.dot(pooled, w1_ref[...], preferred_element_type=jnp.float32) + b1_ref[...]
    h = jnp.maximum(h, 0.0)
    g = jnp.dot(h, w2_ref[...], preferred_element_type=jnp.float32) + b2_ref[...]
    gate = jnp.clip(g + 3.0, 0.0, 6.0) * (1.0 / 6.0)                # hard_sigmoid, (1, C)
    o_ref[0] = (x * gate[None]).astype(o_ref.dtype)


@jax.jit
def se_apply(x, w1, b1, w2, b2):
    N, H, W, C = x.shape
    R = w1.shape[1]
    return pl.pallas_call(
        _se_kernel,
        out_shape=jax.ShapeDtypeStruct((N, H, W, C), jnp.bfloat16),
        grid=(N,),
        in_specs=[
            pl.BlockSpec((1, H, W, C), lambda n: (n, 0, 0, 0)),
            pl.BlockSpec((C, R), lambda n: (0, 0)),
            pl.BlockSpec((1, R), lambda n: (0, 0)),
            pl.BlockSpec((R, C), lambda n: (0, 0)),
            pl.BlockSpec((1, C), lambda n: (0, 0)),
        ],
        out_specs=pl.BlockSpec((1, H, W, C), lambda n: (n, 0, 0, 0)),
        compiler_params=pltpu.CompilerParams(dimension_semantics=("parallel",)),
    )(x, w1, b1, w2, b2)


# ----------------------------------------------------------------------------
# conv wrappers (JAX glue around Pallas kernels)
# ----------------------------------------------------------------------------
def _extract_taps(x, kh, kw, stride, padding, dilation):
    # TODO(synk): im2col patch extraction stays in JAX (rectangular-window glue only).
    N, H, W, C = x.shape
    sh, sw = stride
    ph, pw_ = padding
    dh, dw_ = dilation
    Ho = (H + 2 * ph - dh * (kh - 1) - 1) // sh + 1
    Wo = (W + 2 * pw_ - dw_ * (kw - 1) - 1) // sw + 1
    xp = jnp.pad(x, ((0, 0), (ph, ph), (pw_, pw_), (0, 0)))
    taps = []
    for i in range(kh):
        for j in range(kw):
            taps.append(
                xp[:, i * dh: i * dh + (Ho - 1) * sh + 1: sh,
                      j * dw_: j * dw_ + (Wo - 1) * sw + 1: sw, :])
    return taps, Ho, Wo


def conv2d(x, p, act="none"):
    kh, kw = p["kh"], p["kw"]
    N, H, W, C = x.shape
    Cout = p["w"].shape[1]
    if (kh, kw) == (1, 1) and p["stride"] == (1, 1) and p["padding"] == (0, 0):
        patches = x.reshape(N * H * W, C)
        Ho, Wo = H, W
    else:
        taps, Ho, Wo = _extract_taps(x, kh, kw, p["stride"], p["padding"], p["dilation"])
        patches = jnp.concatenate(taps, axis=-1).reshape(N * Ho * Wo, kh * kw * C)
    y = matmul_bias_act(patches, p["w"], p["bias"], act=act)
    return y.reshape(N, Ho, Wo, Cout)


def dwconv2d(x, p, act="none"):
    assert p["dilation"] == (1, 1)
    return _dwconv_impl(x, p["w"], p["bias"], kh=p["kh"], kw=p["kw"],
                        stride=p["stride"], padding=p["padding"], act=act)


# ----------------------------------------------------------------------------
# deterministic parameter generator (BN folded at build time, bf16 MXU weights)
# ----------------------------------------------------------------------------
class ParamGen:
    def __init__(self, seed=0):
        self._key = jax.random.PRNGKey(seed)
        self._i = 0

    def _next(self, shape, scale=1.0):
        self._i += 1
        k = jax.random.fold_in(self._key, self._i)
        return jax.random.normal(k, shape, jnp.float32) * scale

    def conv(self, cin, cout, k, stride=1, padding=0, dilation=1, bias=False, bn=True,
             dtype=jnp.bfloat16):
        kh, kw = _pair(k)
        fan_in = kh * kw * cin
        w = self._next((kh * kw * cin, cout), 1.0 / math.sqrt(fan_in))
        if bn:  # BatchNorm folded to affine (inference semantics)
            scale = 1.0 + 0.1 * self._next((cout,))
            b = 0.1 * self._next((cout,))
        else:
            scale = jnp.ones((cout,), jnp.float32)
            b = 0.1 * self._next((cout,)) if bias else jnp.zeros((cout,), jnp.float32)
        w = (w * scale[None, :]).astype(dtype)          # fold BN scale into weight columns
        return dict(w=w, bias=b.reshape(1, cout).astype(jnp.float32),
                    kh=kh, kw=kw, stride=_pair(stride), padding=_pair(padding),
                    dilation=_pair(dilation), dw=False)

    def dwconv(self, c, k, stride=1, padding=0, dilation=1, bn=True):
        kh, kw = _pair(k)
        w = self._next((kh * kw, c), 1.0 / math.sqrt(kh * kw))
        if bn:
            scale = 1.0 + 0.1 * self._next((c,))
            b = 0.1 * self._next((c,))
        else:
            scale = jnp.ones((c,), jnp.float32)
            b = jnp.zeros((c,), jnp.float32)
        w = (w * scale[None, :]).astype(jnp.float32)
        return dict(w=w, bias=b.reshape(1, c).astype(jnp.float32),
                    kh=kh, kw=kw, stride=_pair(stride), padding=_pair(padding),
                    dilation=_pair(dilation), dw=True)


# ----------------------------------------------------------------------------
# module builders / apply functions
# ----------------------------------------------------------------------------
def build_ghost_module(pg, inp, oup, kernel_size=1, ratio=2, dw_size=3, relu=True,
                       mode="original"):
    init = math.ceil(oup / ratio)
    p = dict(mode=mode, oup=oup, relu=relu,
             primary=pg.conv(inp, init, kernel_size, 1, kernel_size // 2, bn=True),
             cheap=pg.dwconv(init, dw_size, 1, dw_size // 2, bn=True))
    if mode == "attn":
        p["short1"] = pg.conv(inp, oup, kernel_size, 1, kernel_size // 2, bn=True)
        p["short2"] = pg.dwconv(oup, (1, 5), 1, (0, 2), bn=True)
        p["short3"] = pg.dwconv(oup, (5, 1), 1, (2, 0), bn=True)
    return p


def apply_ghost_module(p, x):
    act = "relu" if p["relu"] else "none"
    x1 = conv2d(x, p["primary"], act=act)
    x2 = dwconv2d(x1, p["cheap"], act=act)
    # TODO(synk): channel concat kept in JAX (single bf16 copy, not fused into a kernel).
    out = jnp.concatenate([x1, x2], axis=-1)[..., :p["oup"]]
    if p["mode"] == "original":
        return out
    # attn branch: avg_pool2d(2,2) -> 1x1 conv -> (1,5) dw -> (5,1) dw -> sigmoid -> 2x nearest up
    N, H, W, C = x.shape
    xp = x.astype(jnp.float32).reshape(N, H // 2, 2, W // 2, 2, C).mean(axis=(2, 4))
    xp = xp.astype(jnp.bfloat16)
    res = conv2d(xp, p["short1"], act="none")
    res = dwconv2d(res, p["short2"], act="none")
    res = dwconv2d(res, p["short3"], act="none")
    gate = jax.nn.sigmoid(res.astype(jnp.float32))
    gate = jnp.repeat(jnp.repeat(gate, 2, axis=1), 2, axis=2)  # nearest, exact 2x
    return (out.astype(jnp.float32) * gate).astype(jnp.bfloat16)


def build_se(pg, in_chs, se_ratio=0.25):
    reduced = _make_divisible(in_chs * se_ratio, 4)
    r = pg.conv(in_chs, reduced, 1, bias=True, bn=False, dtype=jnp.float32)
    e = pg.conv(reduced, in_chs, 1, bias=True, bn=False, dtype=jnp.float32)
    return dict(w1=r["w"], b1=r["bias"], w2=e["w"], b2=e["bias"])


def apply_se(p, x):
    return se_apply(x, p["w1"], p["b1"], p["w2"], p["b2"])


def build_bottleneck(pg, in_chs, mid_chs, out_chs, k, stride, se_ratio, layer_id):
    mode = "original" if layer_id <= 1 else "attn"
    p = dict(stride=stride,
             ghost1=build_ghost_module(pg, in_chs, mid_chs, relu=True, mode=mode))
    if stride > 1:
        p["conv_dw"] = pg.dwconv(mid_chs, k, stride, (k - 1) // 2, bn=True)
    if se_ratio is not None and se_ratio > 0.0:
        p["se"] = build_se(pg, mid_chs, se_ratio)
    p["ghost2"] = build_ghost_module(pg, mid_chs, out_chs, relu=False, mode="original")
    if in_chs == out_chs and stride == 1:
        p["shortcut"] = None
    else:
        p["shortcut"] = dict(dw=pg.dwconv(in_chs, k, stride, (k - 1) // 2, bn=True),
                             pw=pg.conv(in_chs, out_chs, 1, bn=True))
    return p


def apply_bottleneck(p, x):
    residual = x
    x = apply_ghost_module(p["ghost1"], x)
    if p["stride"] > 1:
        x = dwconv2d(x, p["conv_dw"], act="none")
    if "se" in p:
        x = apply_se(p["se"], x)
    x = apply_ghost_module(p["ghost2"], x)
    if p["shortcut"] is None:
        sc = residual
    else:
        sc = dwconv2d(residual, p["shortcut"]["dw"], act="none")
        sc = conv2d(sc, p["shortcut"]["pw"], act="none")
    return x + sc


# ----------------------------------------------------------------------------
# full network: GhostNetV2P3_justdila
# ----------------------------------------------------------------------------
CFGS = [[[3, 16, 16, 0, 1]], [[3, 48, 24, 0, 2]], [[3, 72, 24, 0, 1]],
        [[5, 72, 40, 0.25, 2]], [[5, 120, 40, 0.25, 1]], [[3, 240, 80, 0, 1]],
        [[3, 200, 80, 0, 1], [3, 184, 80, 0, 1], [3, 184, 80, 0, 1],
         [3, 480, 112, 0.25, 1], [3, 672, 112, 0.25, 1]],
        [[5, 672, 160, 0.25, 1]],
        [[5, 960, 160, 0, 1], [5, 960, 160, 0.25, 1],
         [5, 960, 160, 0, 1], [5, 960, 160, 0.25, 1]]]


def build_network(pg, width=1.0):
    out_ch = _make_divisible(16 * width, 4)
    params = dict(stem=pg.conv(3, out_ch, 3, 2, 1, bn=True))
    in_ch = out_ch
    stages, layer_id = [], 0
    for cfg in CFGS:
        layers = []
        for k, exp_size, c, se_ratio, s in cfg:
            oc = _make_divisible(c * width, 4)
            hc = _make_divisible(exp_size * width, 4)
            layers.append(build_bottleneck(pg, in_ch, hc, oc, k, s, se_ratio, layer_id))
            in_ch = oc
            layer_id += 1
        stages.append(layers)
    params["stages"] = stages
    # backend: dilated 3x3 convs (dilation=2, padding=2, bias, no BN) + ReLU
    backend_feat = [_make_divisible(c * width, 4) for c in [160, 160, 160, 120, 80, 40]]
    backend, bin_ch = [], _make_divisible(160 * width, 4)
    for v in backend_feat:
        backend.append(pg.conv(bin_ch, v, 3, 1, 2, 2, bias=True, bn=False))
        bin_ch = v
    params["backend"] = backend
    params["out"] = pg.conv(bin_ch, 1, 1, bias=True, bn=False)
    return params


def forward(params, x):
    # x: NHWC
    x = x.astype(jnp.bfloat16)
    x = conv2d(x, params["stem"], act="relu")
    for stage in params["stages"]:
        for blk in stage:
            x = apply_bottleneck(blk, x)
    for cp in params["backend"]:
        x = conv2d(x, cp, act="relu")
    out = conv2d(x, params["out"], act="none")
    return out.astype(jnp.float32)


if __name__ == "__main__":
    key = jax.random.PRNGKey(0)
    # equivalent to a PyTorch NCHW input of shape (2, 3, 64, 64)
    x = jax.random.normal(key, (2, 64, 64, 3), jnp.float32)

    pg = ParamGen(seed=0)
    params = build_network(pg, width=1.0)

    out = forward(params, x)
    out = jax.block_until_ready(out)

    # PyTorch output would be (2, 1, 8, 8) NCHW -> (2, 8, 8, 1) NHWC here
    assert out.shape == (2, 8, 8, 1), out.shape
    assert bool(jnp.all(jnp.isfinite(out)))
    print("KERNEL_OK")
</pallas_src>

<mosaic_0001>
module attributes {stable_mosaic.version = 11 : i64} {
  func.func @_mm_kernel(%arg0: i32, %arg1: memref<512x27xbf16, #tpu.memory_space<vmem>>, %arg2: memref<27x16xbf16, #tpu.memory_space<vmem>>, %arg3: memref<1x16xf32, #tpu.memory_space<vmem>>, %arg4: memref<512x16xbf16, #tpu.memory_space<vmem>>) attributes {dimension_semantics = [#tpu.dimension_semantics<parallel>], iteration_bounds = array<i64: 4>, scalar_prefetch = 0 : i64, scratch_operands = 0 : i64, tpu.core_type = #tpu.core_type<tc>, window_params = [{transform_indices = @transform_0, window_bounds = array<i64: 512, 27>}, {pipeline_mode = #tpu.pipeline_mode<synchronous>, transform_indices = @transform_1, window_bounds = array<i64: 27, 16>}, {pipeline_mode = #tpu.pipeline_mode<synchronous>, transform_indices = @transform_2, window_bounds = array<i64: 1, 16>}, {transform_indices = @transform_3, window_bounds = array<i64: 512, 16>}]} {
    %c0 = arith.constant 0 : index
    %c0_0 = arith.constant 0 : index
    %0 = vector.load %arg1[%c0, %c0_0] : memref<512x27xbf16, #tpu.memory_space<vmem>>, vector<512x27xbf16>
    %c0_1 = arith.constant 0 : index
    %c0_2 = arith.constant 0 : index
    %1 = vector.load %arg2[%c0_1, %c0_2] : memref<27x16xbf16, #tpu.memory_space<vmem>>, vector<27x16xbf16>
    %cst = arith.constant dense<0.000000e+00> : vector<512x16xf32>
    %2 = tpu.matmul %0, %1, %cst {dimension_numbers = #tpu.dot_dimension_numbers<[1], [0], [0], [1], [0, 0, 1, 1], [], []>} : vector<512x27xbf16>, vector<27x16xbf16>, vector<512x16xf32> -> vector<512x16xf32>
    %c0_3 = arith.constant 0 : index
    %c0_4 = arith.constant 0 : index
    %3 = vector.load %arg3[%c0_3, %c0_4] : memref<1x16xf32, #tpu.memory_space<vmem>>, vector<1x16xf32>
    %4 = vector.broadcast %3 : vector<1x16xf32> to vector<512x16xf32>
    %5 = arith.addf %2, %4 : vector<512x16xf32>
    %cst_5 = arith.constant 0.000000e+00 : f32
    %6 = vector.broadcast %cst_5 : f32 to vector<512x16xf32>
    %7 = arith.maximumf %5, %6 : vector<512x16xf32>
    %8 = arith.truncf %7 : vector<512x16xf32> to vector<512x16xbf16>
    %c0_6 = arith.constant 0 : index
    %c0_7 = arith.constant 0 : index
    %9 = vector.load %arg4[%c0_6, %c0_7] : memref<512x16xbf16, #tpu.memory_space<vmem>>, vector<512x16xbf16>
    tpu.vector_store %arg4[%c0_6, %c0_7], %8 {strides = array<i32>} : memref<512x16xbf16, #tpu.memory_space<vmem>>, vector<512x16xbf16>,
    return
  }
  func.func @transform_0(%arg0: i32) -> (i32, i32) {
    %c0_i32 = arith.constant 0 : i32
    %c0_i32_0 = arith.constant 0 : i32
    return %arg0, %c0_i32 : i32, i32
  }
  func.func @transform_1(%arg0: i32) -> (i32, i32) {
    %c0_i32 = arith.constant 0 : i32
    %c0_i32_0 = arith.constant 0 : i32
    %c0_i32_1 = arith.constant 0 : i32
    return %c0_i32, %c0_i32_0 : i32, i32
  }
  func.func @transform_2(%arg0: i32) -> (i32, i32) {
    %c0_i32 = arith.constant 0 : i32
    %c0_i32_0 = arith.constant 0 : i32
    %c0_i32_1 = arith.constant 0 : i32
    return %c0_i32, %c0_i32_0 : i32, i32
  }
  func.func @transform_3(%arg0: i32) -> (i32, i32) {
    %c0_i32 = arith.constant 0 : i32
    %c0_i32_0 = arith.constant 0 : i32
    return %arg0, %c0_i32 : i32, i32
  }
}

</mosaic_0001>

<llo_original>
// kernel: matmul_bias_act.1
$region0: #{matmul_bias_act.1}
  #allocation0 [shape = 'u32[]', space=smem, size = 0x4, offset = 0x4, fixed_abs, tag = 'smem constant byte address 0x4 - core index']
  #allocation1 [shape = 'u32[72,128]{1,0:T(1,128)}', space=vmem, size = 0x9000, scoped, tag = 'internal scratch']
  %s0 = inlined_call_operand.vmem [shape: bf16[2048,27], index: 0, kind: input, shape index: {}]
  %s1 = inlined_call_operand.vmem [shape: bf16[27,16], index: 1, kind: input, shape index: {}]
  %s2 = inlined_call_operand.vmem [shape: f32[1,16], index: 2, kind: input, shape index: {}]
  %s3 = inlined_call_operand.vmem [shape: bf16[2048,16], index: 3, kind: output, shape index: {}]
  %s4 = sld [smem:[#allocation0]]
  $region45: #{matmul_bias_act.1} parent=0
    _
  %s6 = ssub.s32 1, %s4
  %s7 = scalar_select 0, %s6, %s4
  loop: start=0, step=1, limit=6
  $region2: #{matmul_bias_act.1} parent=0 // loop_pre_header
    _
  $region3: #{matmul_bias_act.1} parent=0 // loop_header
    %s9 = sphi 0, %s13
    %p10 = scmp.ge.s32.totalorder %s9, 6
    %s19 = sphi 0, %s21
    %s22 = sphi 0, %s19
    %s23 = sphi 0, %s22
    %s39 = sphi 0, %s23
    %s43 = sphi 0, %s43
    %s45 = sphi 0, %s43
    %s46 = sphi 0, %s45
    %s60 = sphi 0, %s46
    %s64 = sphi 0, %s64
    %s66 = sphi 0, %s64
    %s67 = sphi 0, %s66
    %s81 = sphi 0, %s67
    %s87 = sphi 0, %s89
    %s90 = sphi 0, %s87
    %s91 = sphi 0, %s90
    %s107 = sphi 0, %s91
  $region4: #{matmul_bias_act.1} parent=0 // loop_header_branch
    %12 = sbr.rel (%p10) target = $region8
  $region5: #{matmul_bias_act.1} parent=0 // loop_body
    %s14 = ssub.s32 %s9, 1
    %s15 = ssub.s32 %s9, 2
    %s16 = sadd.s32 %s9, 1
    %s17 = ssub.s32 %s9, %s16
    %p18 = scmp.eq.s32.totalorder %s17, 0
    %s20 = sadd.s32 %s19, 1
    %s21 = scalar_select %p18, %s19, %s20
    %p24 = pneg %p18
    %p25 = scmp.eq.s32.totalorder %s9, 3
    %p26 = por %p24, %p25
    %p27 = scmp.ne.s32.totalorder %s19, %s22
    %p28 = scmp.eq.s32.totalorder %s9, 0
    %p29 = por %p27, %p28
    %p30 = scmp.ne.s32.totalorder %s19, %s22
    %p31 = scmp.eq.s32.totalorder %s14, 3
    %p32 = por %p30, %p31
    %p33 = scmp.ne.s32.totalorder %s22, %s23
    %p34 = scmp.eq.s32.totalorder %s14, 0
    %p35 = por %p33, %p34
    %p36 = scmp.ne.s32.totalorder %s22, %s23
    %p37 = scmp.eq.s32.totalorder %s15, 3
    %p38 = por %p36, %p37
    %p40 = scmp.ne.s32.totalorder %s23, %s39
    %p41 = scmp.eq.s32.totalorder %s15, 0
    %p42 = por %p40, %p41
    %s44 = sadd.s32 %s43, 1
    %p47 = scmp.eq.s32.totalorder %s9, 3
    %p48 = scmp.ne.s32.totalorder %s43, %s45
    %p49 = scmp.eq.s32.totalorder %s9, 0
    %p50 = por %p48, %p49
    %p51 = scmp.ne.s32.totalorder %s43, %s45
    %p52 = scmp.eq.s32.totalorder %s14, 3
    %p53 = por %p51, %p52
    %p54 = scmp.ne.s32.totalorder %s45, %s46
    %p55 = scmp.eq.s32.totalorder %s14, 0
    %p56 = por %p54, %p55
    %p57 = scmp.ne.s32.totalorder %s45, %s46
    %p58 = scmp.eq.s32.totalorder %s15, 3
    %p59 = por %p57, %p58
    %p61 = scmp.ne.s32.totalorder %s46, %s60
    %p62 = scmp.eq.s32.totalorder %s15, 0
    %p63 = por %p61, %p62
    %s65 = sadd.s32 %s64, 1
    %p68 = scmp.eq.s32.totalorder %s9, 3
    %p69 = scmp.ne.s32.totalorder %s64, %s66
    %p70 = scmp.eq.s32.totalorder %s9, 0
    %p71 = por %p69, %p70
    %p72 = scmp.ne.s32.totalorder %s64, %s66
    %p73 = scmp.eq.s32.totalorder %s14, 3
    %p74 = por %p72, %p73
    %p75 = scmp.ne.s32.totalorder %s66, %s67
    %p76 = scmp.eq.s32.totalorder %s14, 0
    %p77 = por %p75, %p76
    %p78 = scmp.ne.s32.totalorder %s66, %s67
    %p79 = scmp.eq.s32.totalorder %s15, 3
    %p80 = por %p78, %p79
    %p82 = scmp.ne.s32.totalorder %s67, %s81
    %p83 = scmp.eq.s32.totalorder %s15, 0
    %p84 = por %p82, %p83
    %s85 = ssub.s32 %s9, %s16
    %p86 = scmp.eq.s32.totalorder %s85, 0
    %s88 = sadd.s32 %s87, 1
    %s89 = scalar_select %p86, %s87, %s88
    %p92 = pneg %p86
    %p93 = scmp.eq.s32.totalorder %s9, 3
    %p94 = por %p92, %p93
    %p95 = scmp.ne.s32.totalorder %s87, %s90
    %p96 = scmp.eq.s32.totalorder %s9, 0
    %p97 = por %p95, %p96
    %p98 = scmp.ne.s32.totalorder %s87, %s90
    %p99 = scmp.eq.s32.totalorder %s14, 3
    %p100 = por %p98, %p99
    %p101 = scmp.ne.s32.totalorder %s90, %s91
    %p102 = scmp.eq.s32.totalorder %s14, 0
    %p103 = por %p101, %p102
    %p104 = scmp.ne.s32.totalorder %s90, %s91
    %p105 = scmp.eq.s32.totalorder %s15, 3
    %p106 = por %p104, %p105
    %p108 = scmp.ne.s32.totalorder %s91, %s107
    %p109 = scmp.eq.s32.totalorder %s15, 0
    %p110 = por %p108, %p109
    %p111 = scmp.le.s32.totalorder 1, %s9
    %p112 = scmp.lt.s32.totalorder %s9, 5
    %p113 = pnand %p111, %p112
    %p114 = pneg %p113
    // Predicated region
    $region9: #{matmul_bias_act.1} parent=5 // pred_check
      _
    $region10: #{matmul_bias_act.1} parent=5 // pred_check_branch
      %116 = sbr.rel (%p113) target = $region12
    $region11: #{matmul_bias_act.1} parent=5 // pred_region
      %s117 = ssub.s32 %s9, 1
      // Predicated region
      $region13: #{matmul_bias_act.1} parent=11 // pred_check
        %p118 = pneg %p56
      $region14: #{matmul_bias_act.1} parent=11 // pred_check_branch
        %120 = sbr.rel (%p118) target = $region16
      $region15: #{matmul_bias_act.1} parent=11 // pred_region
        _
      $region16: #{matmul_bias_act.1} parent=11 // pred_fallthru
        _
      // Predicated region
      $region17: #{matmul_bias_act.1} parent=11 // pred_check
        %p121 = pneg %p77
      $region18: #{matmul_bias_act.1} parent=11 // pred_check_branch
        %123 = sbr.rel (%p121) target = $region20
      $region19: #{matmul_bias_act.1} parent=11 // pred_region
        _
      $region20: #{matmul_bias_act.1} parent=11 // pred_fallthru
        _
    $region12: #{matmul_bias_act.1} parent=5 // pred_fallthru
      _
    %p124 = scmp.lt.s32.totalorder %s9, 4
    // Predicated region
    $region21: #{matmul_bias_act.1} parent=5 // pred_check
      %p125 = pneg %p124
    $region22: #{matmul_bias_act.1} parent=5 // pred_check_branch
      %127 = sbr.rel (%p125) target = $region24
    $region23: #{matmul_bias_act.1} parent=5 // pred_region
      // Predicated region
      $region25: #{matmul_bias_act.1} parent=23 // pred_check
        %p128 = pneg %p29
      $region26: #{matmul_bias_act.1} parent=23 // pred_check_branch
        %130 = sbr.rel (%p128) target = $region28
      $region27: #{matmul_bias_act.1} parent=23 // pred_region
        %s131 = smul.u32 64, %s9
        %p132 = scmp.lt.s32.totalorder %s131, 255
        %s133 = scalar_select %p132, %s131, 255
        %s134 = smul.addr %s133, 4
        %s135 = scalar_lea.vmem %s0, %s134
        %s136 = smul.u32 64, %s9
      $region28: #{matmul_bias_act.1} parent=23 // pred_fallthru
        _
    $region24: #{matmul_bias_act.1} parent=5 // pred_fallthru
      _
    %p137 = scmp.le.s32.totalorder 1, %s9
    %p138 = scmp.lt.s32.totalorder %s9, 5
    %p139 = pnand %p137, %p138
    %p140 = pneg %p139
    // Predicated region
    $region29: #{matmul_bias_act.1} parent=5 // pred_check
      _
    $region30: #{matmul_bias_act.1} parent=5 // pred_check_branch
      %142 = sbr.rel (%p139) target = $region32
    $region31: #{matmul_bias_act.1} parent=5 // pred_region
      %s143 = ssub.s32 %s9, 1
      %s144 = smul.u32 64, %s14
      %p145 = scmp.lt.s32.totalorder %s144, 255
      %s146 = scalar_select %p145, %s144, 255
      %s147 = smul.addr %s146, 4
      %s148 = scalar_lea.vmem %s0, %s147
      %p149 = pneg %p35
      %p150 = pneg %p32
      %p151 = pneg %p56
      %p152 = pneg %p53
      %p153 = pneg %p77
      %p154 = pneg %p74
      %p155 = pneg %p103
      %p156 = pneg %p100
      %s157 = smul.u32 64, %s14
      %p158 = scmp.lt.s32.totalorder %s157, 255
      %s159 = scalar_select %p158, %s157, 255
      %s160 = smul.addr %s159, 4
      %s161 = scalar_lea.vmem %s3, %s160
      %s162 = smul.u32 64, %s14
      %p163 = scmp.lt.s32.totalorder %s162, 255
      %s164 = scalar_select %p163, %s162, 255
      %s165 = smul.addr %s164, 4
      %s166 = scalar_lea.vmem %s0, %s165
      %s167 = smul.u32 64, %s14
      %s168 = smul.u32 64, %s14
      %p169 = scmp.lt.s32.totalorder %s168, 255
      %s170 = scalar_select %p169, %s168, 255
      %s171 = smul.addr %s170, 4
      %s172 = scalar_lea.vmem %s3, %s171
      %s173 = smul.u32 64, %s14
      %v175 = vld [vmem:[%s166] sm:$0xf]
      %v176 = vld [vmem:[%s166 + $0x4] sm:$0xf]
      %v177 = vld [vmem:[%s166 + $0x8] sm:$0xf]
      %v178 = vld [vmem:[%s166 + $0xc] sm:$0xf]
      %v179 = vld [vmem:[%s166 + $0x10] sm:$0xf]
      %v180 = vld [vmem:[%s166 + $0x14] sm:$0xf]
      %v181 = vld [vmem:[%s166 + $0x18] sm:$0xf]
      %v182 = vld [vmem:[%s166 + $0x1c] sm:$0xf]
      %v183 = vld [vmem:[%s166 + $0x20] sm:$0xf]
      %v184 = vld [vmem:[%s166 + $0x24] sm:$0xf]
      %v185 = vld [vmem:[%s166 + $0x28] sm:$0xf]
      %v186 = vld [vmem:[%s166 + $0x2c] sm:$0xf]
      %v187 = vld [vmem:[%s166 + $0x30] sm:$0xf]
      %v188 = vld [vmem:[%s166 + $0x34] sm:$0xf]
      %v189 = vld [vmem:[%s166 + $0x38] sm:$0xf]
      %v190 = vld [vmem:[%s166 + $0x3c] sm:$0xf]
      %v191 = vld [vmem:[%s166 + $0x40] sm:$0xf]
      %v192 = vld [vmem:[%s166 + $0x44] sm:$0xf]
      %v193 = vld [vmem:[%s166 + $0x48] sm:$0xf]
      %v194 = vld [vmem:[%s166 + $0x4c] sm:$0xf]
      %v195 = vld [vmem:[%s166 + $0x50] sm:$0xf]
      %v196 = vld [vmem:[%s166 + $0x54] sm:$0xf]
      %v197 = vld [vmem:[%s166 + $0x58] sm:$0xf]
      %v198 = vld [vmem:[%s166 + $0x5c] sm:$0xf]
      %v199 = vld [vmem:[%s166 + $0x60] sm:$0xf]
      %v200 = vld [vmem:[%s166 + $0x64] sm:$0xf]
      %v201 = vld [vmem:[%s166 + $0x68] sm:$0xf]
      %v202 = vld [vmem:[%s166 + $0x6c] sm:$0xf]
      %v203 = vld [vmem:[%s166 + $0x70] sm:$0xf]
      %v204 = vld [vmem:[%s166 + $0x74] sm:$0xf]
      %v205 = vld [vmem:[%s166 + $0x78] sm:$0xf]
      %v206 = vld [vmem:[%s166 + $0x7c] sm:$0xf]
      %v207 = vld [vmem:[%s166 + $0x80] sm:$0xf]
      %v208 = vld [vmem:[%s166 + $0x84] sm:$0xf]
      %v209 = vld [vmem:[%s166 + $0x88] sm:$0xf]
      %v210 = vld [vmem:[%s166 + $0x8c] sm:$0xf]
      %v211 = vld [vmem:[%s166 + $0x90] sm:$0xf]
      %v212 = vld [vmem:[%s166 + $0x94] sm:$0xf]
      %v213 = vld [vmem:[%s166 + $0x98] sm:$0xf]
      %v214 = vld [vmem:[%s166 + $0x9c] sm:$0xf]
      %v215 = vld [vmem:[%s166 + $0xa0] sm:$0xf]
      %v216 = vld [vmem:[%s166 + $0xa4] sm:$0xf]
      %v217 = vld [vmem:[%s166 + $0xa8] sm:$0xf]
      %v218 = vld [vmem:[%s166 + $0xac] sm:$0xf]
      %v219 = vld [vmem:[%s166 + $0xb0] sm:$0xf]
      %v220 = vld [vmem:[%s166 + $0xb4] sm:$0xf]
      %v221 = vld [vmem:[%s166 + $0xb8] sm:$0xf]
      %v222 = vld [vmem:[%s166 + $0xbc] sm:$0xf]
      %v223 = vld [vmem:[%s166 + $0xc0] sm:$0xf]
      %v224 = vld [vmem:[%s166 + $0xc4] sm:$0xf]
      %v225 = vld [vmem:[%s166 + $0xc8] sm:$0xf]
      %v226 = vld [vmem:[%s166 + $0xcc] sm:$0xf]
      %v227 = vld [vmem:[%s166 + $0xd0] sm:$0xf]
      %v228 = vld [vmem:[%s166 + $0xd4] sm:$0xf]
      %v229 = vld [vmem:[%s166 + $0xd8] sm:$0xf]
      %v230 = vld [vmem:[%s166 + $0xdc] sm:$0xf]
      %v231 = vld [vmem:[%s166 + $0xe0] sm:$0xf]
      %v232 = vld [vmem:[%s166 + $0xe4] sm:$0xf]
      %v233 = vld [vmem:[%s166 + $0xe8] sm:$0xf]
      %v234 = vld [vmem:[%s166 + $0xec] sm:$0xf]
      %v235 = vld [vmem:[%s166 + $0xf0] sm:$0xf]
      %v236 = vld [vmem:[%s166 + $0xf4] sm:$0xf]
      %v237 = vld [vmem:[%s166 + $0xf8] sm:$0xf]
      %v238 = vld [vmem:[%s166 + $0xfc] sm:$0xf]
      %v239 = vld [vmem:[%s1] sm:$0xf]
      %v240 = vld [vmem:[%s1 + $0x4] sm:$0xf]
      %v241 = vld [vmem:[%s1 + $0x8] sm:$0xf]
      %v242 = vld [vmem:[%s1 + $0xc] sm:$0x3]
      %v243 = vld [vmem:[%s2] sm:$0x1]
      %v245 = vperm.slane %v243, 0
      %v311 = vunpack.c.l.b16 %v175
      %v312 = vunpack.c.l.b16 %v176
      %v313 = vunpack.c.l.b16 %v177
      %v314 = vunpack.c.l.b16 %v178
      %v315 = vunpack.c.l.b16 %v179
      %v316 = vunpack.c.l.b16 %v180
      %v317 = vunpack.c.l.b16 %v181
      %v318 = vunpack.c.l.b16 %v182
      %v319 = vunpack.c.l.b16 %v183
      %v320 = vunpack.c.l.b16 %v184
      %v321 = vunpack.c.l.b16 %v185
      %v322 = vunpack.c.l.b16 %v186
      %v323 = vunpack.c.l.b16 %v187
      %v324 = vunpack.c.l.b16 %v188
      %v325 = vunpack.c.l.b16 %v189
      %v326 = vunpack.c.l.b16 %v190
      %v327 = vunpack.c.l.b16 %v191
      %v328 = vunpack.c.l.b16 %v192
      %v329 = vunpack.c.l.b16 %v193
      %v330 = vunpack.c.l.b16 %v194
      %v331 = vunpack.c.l.b16 %v195
      %v332 = vunpack.c.l.b16 %v196
      %v333 = vunpack.c.l.b16 %v197
      %v334 = vunpack.c.l.b16 %v198
      %v335 = vunpack.c.l.b16 %v199
      %v336 = vunpack.c.l.b16 %v200
      %v337 = vunpack.c.l.b16 %v201
      %v338 = vunpack.c.l.b16 %v202
      %v339 = vunpack.c.l.b16 %v203
      %v340 = vunpack.c.l.b16 %v204
      %v341 = vunpack.c.l.b16 %v205
      %v342 = vunpack.c.l.b16 %v206
      %v343 = vunpack.c.l.b16 %v207
      %v344 = vunpack.c.l.b16 %v208
      %v345 = vunpack.c.l.b16 %v209
      %v346 = vunpack.c.l.b16 %v210
      %v347 = vunpack.c.l.b16 %v211
      %v348 = vunpack.c.l.b16 %v212
      %v349 = vunpack.c.l.b16 %v213
      %v350 = vunpack.c.l.b16 %v214
      %v351 = vunpack.c.l.b16 %v215
      %v352 = vunpack.c.l.b16 %v216
      %v353 = vunpack.c.l.b16 %v217
      %v354 = vunpack.c.l.b16 %v218
      %v355 = vunpack.c.l.b16 %v219
      %v356 = vunpack.c.l.b16 %v220
      %v357 = vunpack.c.l.b16 %v221
      %v358 = vunpack.c.l.b16 %v222
      %v359 = vunpack.c.l.b16 %v223
      %v360 = vunpack.c.l.b16 %v224
      %v361 = vunpack.c.l.b16 %v225
      %v362 = vunpack.c.l.b16 %v226
      %v363 = vunpack.c.l.b16 %v227
      %v364 = vunpack.c.l.b16 %v228
      %v365 = vunpack.c.l.b16 %v229
      %v366 = vunpack.c.l.b16 %v230
      %v367 = vunpack.c.l.b16 %v231
      %v368 = vunpack.c.l.b16 %v232
      %v369 = vunpack.c.l.b16 %v233
      %v370 = vunpack.c.l.b16 %v234
      %v371 = vunpack.c.l.b16 %v235
      %v372 = vunpack.c.l.b16 %v236
      %v373 = vunpack.c.l.b16 %v237
      %v374 = vunpack.c.l.b16 %v238
      %v375 = vpack.c.b16 %v312, %v311
      %v376 = vpack.c.b16 %v314, %v313
      %v377 = vpack.c.b16 %v316, %v315
      %v378 = vpack.c.b16 %v318, %v317
      %v379 = vpack.c.b16 %v320, %v319
      %v380 = vpack.c.b16 %v322, %v321
      %v381 = vpack.c.b16 %v324, %v323
      %v382 = vpack.c.b16 %v326, %v325
      %v383 = vpack.c.b16 %v328, %v327
      %v384 = vpack.c.b16 %v330, %v329
      %v385 = vpack.c.b16 %v332, %v331
      %v386 = vpack.c.b16 %v334, %v333
      %v387 = vpack.c.b16 %v336, %v335
      %v388 = vpack.c.b16 %v338, %v337
      %v389 = vpack.c.b16 %v340, %v339
      %v390 = vpack.c.b16 %v342, %v341
      %v391 = vpack.c.b16 %v344, %v343
      %v392 = vpack.c.b16 %v346, %v345
      %v393 = vpack.c.b16 %v348, %v347
      %v394 = vpack.c.b16 %v350, %v349
      %v395 = vpack.c.b16 %v352, %v351
      %v396 = vpack.c.b16 %v354, %v353
      %v397 = vpack.c.b16 %v356, %v355
      %v398 = vpack.c.b16 %v358, %v357
      %v399 = vpack.c.b16 %v360, %v359
      %v400 = vpack.c.b16 %v362, %v361
      %v401 = vpack.c.b16 %v364, %v363
      %v402 = vpack.c.b16 %v366, %v365
      %v403 = vpack.c.b16 %v368, %v367
      %v404 = vpack.c.b16 %v370, %v369
      %v405 = vpack.c.b16 %v372, %v371
      %v406 = vpack.c.b16 %v374, %v373
      %v411 = vunpack.c.l.b16 %v239
      %v412 = vunpack.c.l.b16 %v240
      %v413 = vunpack.c.l.b16 %v241
      %v414 = vunpack.c.l.b16 %v242
      %v415 = vpack.c.b16 %v412, %v411
      %v416 = vpack.c.b16 %v414, %v413
      %vm418 = vcmask 220160
      %v420 = vsel %vm418, %v375, 0
      %v423 = vsel %vm418, %v376, 0
      %v426 = vsel %vm418, %v377, 0
      %v429 = vsel %vm418, %v378, 0
      %v432 = vsel %vm418, %v379, 0
      %v435 = vsel %vm418, %v380, 0
      %v438 = vsel %vm418, %v381, 0
      %v441 = vsel %vm418, %v382, 0
      %v444 = vsel %vm418, %v383, 0
      %v447 = vsel %vm418, %v384, 0
      %v450 = vsel %vm418, %v385, 0
      %v453 = vsel %vm418, %v386, 0
      %v456 = vsel %vm418, %v387, 0
      %v459 = vsel %vm418, %v388, 0
      %v462 = vsel %vm418, %v389, 0
      %v465 = vsel %vm418, %v390, 0
      %v468 = vsel %vm418, %v391, 0
      %v471 = vsel %vm418, %v392, 0
      %v474 = vsel %vm418, %v393, 0
      %v477 = vsel %vm418, %v394, 0
      %v480 = vsel %vm418, %v395, 0
      %v483 = vsel %vm418, %v396, 0
      %v486 = vsel %vm418, %v397, 0
      %v489 = vsel %vm418, %v398, 0
      %v492 = vsel %vm418, %v399, 0
      %v495 = vsel %vm418, %v400, 0
      %v498 = vsel %vm418, %v401, 0
      %v501 = vsel %vm418, %v402, 0
      %v504 = vsel %vm418, %v403, 0
      %v507 = vsel %vm418, %v404, 0
      %v510 = vsel %vm418, %v405, 0
      %v513 = vsel %vm418, %v406, 0
      %vm515 = vcmask 1044480
      %vm516 = vcmask 1045504
      %v517 = vsel %vm515, 4294967295, 65535
      %v518 = vsel %vm516, %v517, 0
      %v520 = vand.u32 %v416, %v518
      %522 = vmatpush.bf16.msra.mxu0 0
      %523 = vmatpush.bf16.msra.mxu0 0
      %524 = vmatpush.bf16.msra.mxu0 0
      %525 = vmatpush.bf16.msra.mxu0 0
      %526 = vmatpush.bf16.msra.mxu0 0
      %527 = vmatpush.bf16.msra.mxu0 0
      %528 = vmatpush.bf16.msra.mxu0 %v520
      %529 = vmatpush.bf16.msra.mxu0 %v415
      %530 = vmatmul.bf16.gmra.mxu0 %v420
      %v531 = vpop.f32.mrf.mxu0
      %v532 = vadd.f32 %v245, %v531
      %v533 = vpop.f32.mrf.mxu0
      %v534 = vadd.f32 %v245, %v533
      %535 = vmatmul.bf16.gmra.mxu0 %v423
      %v536 = vpop.f32.mrf.mxu0
      %v537 = vadd.f32 %v245, %v536
      %v538 = vpop.f32.mrf.mxu0
      %v539 = vadd.f32 %v245, %v538
      %540 = vmatmul.bf16.gmra.mxu0 %v426
      %v541 = vpop.f32.mrf.mxu0
      %v542 = vadd.f32 %v245, %v541
      %v543 = vpop.f32.mrf.mxu0
      %v544 = vadd.f32 %v245, %v543
      %545 = vmatmul.bf16.gmra.mxu0 %v429
      %v546 = vpop.f32.mrf.mxu0
      %v547 = vadd.f32 %v245, %v546
      %v548 = vpop.f32.mrf.mxu0
      %v549 = vadd.f32 %v245, %v548
      %550 = vmatmul.bf16.gmra.mxu0 %v432
      %v551 = vpop.f32.mrf.mxu0
      %v552 = vadd.f32 %v245, %v551
      %v553 = vpop.f32.mrf.mxu0
      %v554 = vadd.f32 %v245, %v553
      %555 = vmatmul.bf16.gmra.mxu0 %v435
      %v556 = vpop.f32.mrf.mxu0
      %v557 = vadd.f32 %v245, %v556
      %v558 = vpop.f32.mrf.mxu0
      %v559 = vadd.f32 %v245, %v558
      %560 = vmatmul.bf16.gmra.mxu0 %v438
      %v561 = vpop.f32.mrf.mxu0
      %v562 = vadd.f32 %v245, %v561
      %v563 = vpop.f32.mrf.mxu0
      %v564 = vadd.f32 %v245, %v563
      %565 = vmatmul.bf16.gmra.mxu0 %v441
      %v566 = vpop.f32.mrf.mxu0
      %v567 = vadd.f32 %v245, %v566
      %v568 = vpop.f32.mrf.mxu0
      %v569 = vadd.f32 %v245, %v568
      %570 = vmatmul.bf16.gmra.mxu0 %v444
      %v571 = vpop.f32.mrf.mxu0
      %v572 = vadd.f32 %v245, %v571
      %v573 = vpop.f32.mrf.mxu0
      %v574 = vadd.f32 %v245, %v573
      %575 = vmatmul.bf16.gmra.mxu0 %v447
      %v576 = vpop.f32.mrf.mxu0
      %v577 = vadd.f32 %v245, %v576
      %v578 = vpop.f32.mrf.mxu0
      %v579 = vadd.f32 %v245, %v578
      %580 = vmatmul.bf16.gmra.mxu0 %v450
      %v581 = vpop.f32.mrf.mxu0
      %v582 = vadd.f32 %v245, %v581
      %v583 = vpop.f32.mrf.mxu0
      %v584 = vadd.f32 %v245, %v583
      %585 = vmatmul.bf16.gmra.mxu0 %v453
      %v586 = vpop.f32.mrf.mxu0
      %v587 = vadd.f32 %v245, %v586
      %v588 = vpop.f32.mrf.mxu0
      %v589 = vadd.f32 %v245, %v588
      %590 = vmatmul.bf16.gmra.mxu0 %v456
      %v591 = vpop.f32.mrf.mxu0
      %v592 = vadd.f32 %v245, %v591
      %v593 = vpop.f32.mrf.mxu0
      %v594 = vadd.f32 %v245, %v593
      %595 = vmatmul.bf16.gmra.mxu0 %v459
      %v596 = vpop.f32.mrf.mxu0
      %v597 = vadd.f32 %v245, %v596
      %v598 = vpop.f32.mrf.mxu0
      %v599 = vadd.f32 %v245, %v598
      %600 = vmatmul.bf16.gmra.mxu0 %v462
      %v601 = vpop.f32.mrf.mxu0
      %v602 = vadd.f32 %v245, %v601
      %v603 = vpop.f32.mrf.mxu0
      %v604 = vadd.f32 %v245, %v603
      %605 = vmatmul.bf16.gmra.mxu0 %v465
      %v606 = vpop.f32.mrf.mxu0
      %v607 = vadd.f32 %v245, %v606
      %v608 = vpop.f32.mrf.mxu0
      %v609 = vadd.f32 %v245, %v608
      %610 = vmatmul.bf16.gmra.mxu0 %v468
      %v611 = vpop.f32.mrf.mxu0
      %v612 = vadd.f32 %v245, %v611
      %v613 = vpop.f32.mrf.mxu0
      %v614 = vadd.f32 %v245, %v613
      %615 = vmatmul.bf16.gmra.mxu0 %v471
      %v616 = vpop.f32.mrf.mxu0
      %v617 = vadd.f32 %v245, %v616
      %v618 = vpop.f32.mrf.mxu0
      %v619 = vadd.f32 %v245, %v618
      %620 = vmatmul.bf16.gmra.mxu0 %v474
      %v621 = vpop.f32.mrf.mxu0
      %v622 = vadd.f32 %v245, %v621
      %v623 = vpop.f32.mrf.mxu0
      %v624 = vadd.f32 %v245, %v623
      %625 = vmatmul.bf16.gmra.mxu0 %v477
      %v626 = vpop.f32.mrf.mxu0
      %v627 = vadd.f32 %v245, %v626
      %v628 = vpop.f32.mrf.mxu0
      %v629 = vadd.f32 %v245, %v628
      %630 = vmatmul.bf16.gmra.mxu0 %v480
      %v631 = vpop.f32.mrf.mxu0
      %v632 = vadd.f32 %v245, %v631
      %v633 = vpop.f32.mrf.mxu0
      %v634 = vadd.f32 %v245, %v633
      %635 = vmatmul.bf16.gmra.mxu0 %v483
      %v636 = vpop.f32.mrf.mxu0
      %v637 = vadd.f32 %v245, %v636
      %v638 = vpop.f32.mrf.mxu0
      %v639 = vadd.f32 %v245, %v638
      %640 = vmatmul.bf16.gmra.mxu0 %v486
      %v641 = vpop.f32.mrf.mxu0
      %v642 = vadd.f32 %v245, %v641
      %v643 = vpop.f32.mrf.mxu0
      %v644 = vadd.f32 %v245, %v643
      %645 = vmatmul.bf16.gmra.mxu0 %v489
      %v646 = vpop.f32.mrf.mxu0
      %v647 = vadd.f32 %v245, %v646
      %v648 = vpop.f32.mrf.mxu0
      %v649 = vadd.f32 %v245, %v648
      %650 = vmatmul.bf16.gmra.mxu0 %v492
      %v651 = vpop.f32.mrf.mxu0
      %v652 = vadd.f32 %v245, %v651
      %v653 = vpop.f32.mrf.mxu0
      %v654 = vadd.f32 %v245, %v653
      %655 = vmatmul.bf16.gmra.mxu0 %v495
      %v656 = vpop.f32.mrf.mxu0
      %v657 = vadd.f32 %v245, %v656
      %v658 = vpop.f32.mrf.mxu0
      %v659 = vadd.f32 %v245, %v658
      %660 = vmatmul.bf16.gmra.mxu0 %v498
      %v661 = vpop.f32.mrf.mxu0
      %v662 = vadd.f32 %v245, %v661
      %v663 = vpop.f32.mrf.mxu0
      %v664 = vadd.f32 %v245, %v663
      %665 = vmatmul.bf16.gmra.mxu0 %v501
      %v666 = vpop.f32.mrf.mxu0
      %v667 = vadd.f32 %v245, %v666
      %v668 = vpop.f32.mrf.mxu0
      %v669 = vadd.f32 %v245, %v668
      %670 = vmatmul.bf16.gmra.mxu0 %v504
      %v671 = vpop.f32.mrf.mxu0
      %v672 = vadd.f32 %v245, %v671
      %v673 = vpop.f32.mrf.mxu0
      %v674 = vadd.f32 %v245, %v673
      %675 = vmatmul.bf16.gmra.mxu0 %v507
      %v676 = vpop.f32.mrf.mxu0
      %v677 = vadd.f32 %v245, %v676
      %v678 = vpop.f32.mrf.mxu0
      %v679 = vadd.f32 %v245, %v678
      %680 = vmatmul.bf16.gmra.mxu0 %v510
      %v681 = vpop.f32.mrf.mxu0
      %v682 = vadd.f32 %v245, %v681
      %v683 = vpop.f32.mrf.mxu0
      %v684 = vadd.f32 %v245, %v683
      %685 = vmatmul.bf16.gmra.mxu0 %v513
      %v686 = vpop.f32.mrf.mxu0
      %v687 = vadd.f32 %v245, %v686
      %v688 = vpop.f32.mrf.mxu0
      %v689 = vadd.f32 %v245, %v688
      %690 = vdwg.mxu0
      %v691 = vmax.f32 %v532, 0.0
      %v692 = vmax.f32 %v534, 0.0
      %v693 = vmax.f32 %v537, 0.0
      %v694 = vmax.f32 %v539, 0.0
      %v695 = vmax.f32 %v542, 0.0
      %v696 = vmax.f32 %v544, 0.0
      %v697 = vmax.f32 %v547, 0.0
      %v698 = vmax.f32 %v549, 0.0
      %v699 = vmax.f32 %v552, 0.0
      %v700 = vmax.f32 %v554, 0.0
      %v701 = vmax.f32 %v557, 0.0
      %v702 = vmax.f32 %v559, 0.0
      %v703 = vmax.f32 %v562, 0.0
      %v704 = vmax.f32 %v564, 0.0
      %v705 = vmax.f32 %v567, 0.0
      %v706 = vmax.f32 %v569, 0.0
      %v707 = vmax.f32 %v572, 0.0
      %v708 = vmax.f32 %v574, 0.0
      %v709 = vmax.f32 %v577, 0.0
      %v710 = vmax.f32 %v579, 0.0
      %v711 = vmax.f32 %v582, 0.0
      %v712 = vmax.f32 %v584, 0.0
      %v713 = vmax.f32 %v587, 0.0
      %v714 = vmax.f32 %v589, 0.0
      %v715 = vmax.f32 %v592, 0.0
      %v716 = vmax.f32 %v594, 0.0
      %v717 = vmax.f32 %v597, 0.0
      %v718 = vmax.f32 %v599, 0.0
      %v719 = vmax.f32 %v602, 0.0
      %v720 = vmax.f32 %v604, 0.0
      %v721 = vmax.f32 %v607, 0.0
      %v722 = vmax.f32 %v609, 0.0
      %v723 = vmax.f32 %v612, 0.0
      %v724 = vmax.f32 %v614, 0.0
      %v725 = vmax.f32 %v617, 0.0
      %v726 = vmax.f32 %v619, 0.0
      %v727 = vmax.f32 %v622, 0.0
      %v728 = vmax.f32 %v624, 0.0
      %v729 = vmax.f32 %v627, 0.0
      %v730 = vmax.f32 %v629, 0.0
      %v731 = vmax.f32 %v632, 0.0
      %v732 = vmax.f32 %v634, 0.0
      %v733 = vmax.f32 %v637, 0.0
      %v734 = vmax.f32 %v639, 0.0
      %v735 = vmax.f32 %v642, 0.0
      %v736 = vmax.f32 %v644, 0.0
      %v737 = vmax.f32 %v647, 0.0
      %v738 = vmax.f32 %v649, 0.0
      %v739 = vmax.f32 %v652, 0.0
      %v740 = vmax.f32 %v654, 0.0
      %v741 = vmax.f32 %v657, 0.0
      %v742 = vmax.f32 %v659, 0.0
      %v743 = vmax.f32 %v662, 0.0
      %v744 = vmax.f32 %v664, 0.0
      %v745 = vmax.f32 %v667, 0.0
      %v746 = vmax.f32 %v669, 0.0
      %v747 = vmax.f32 %v672, 0.0
      %v748 = vmax.f32 %v674, 0.0
      %v749 = vmax.f32 %v677, 0.0
      %v750 = vmax.f32 %v679, 0.0
      %v751 = vmax.f32 %v682, 0.0
      %v752 = vmax.f32 %v684, 0.0
      %v753 = vmax.f32 %v687, 0.0
      %v754 = vmax.f32 %v689, 0.0
      %v755 = vpack.c.bf16 %v691, %v691
      %v756 = vpack.c.bf16 %v692, %v692
      %v757 = vpack.c.bf16 %v693, %v693
      %v758 = vpack.c.bf16 %v694, %v694
      %v759 = vpack.c.bf16 %v695, %v695
      %v760 = vpack.c.bf16 %v696, %v696
      %v761 = vpack.c.bf16 %v697, %v697
      %v762 = vpack.c.bf16 %v698, %v698
      %v763 = vpack.c.bf16 %v699, %v699
      %v764 = vpack.c.bf16 %v700, %v700
      %v765 = vpack.c.bf16 %v701, %v701
      %v766 = vpack.c.bf16 %v702, %v702
      %v767 = vpack.c.bf16 %v703, %v703
      %v768 = vpack.c.bf16 %v704, %v704
      %v769 = vpack.c.bf16 %v705, %v705
      %v770 = vpack.c.bf16 %v706, %v706
      %v771 = vpack.c.bf16 %v707, %v707
      %v772 = vpack.c.bf16 %v708, %v708
      %v773 = vpack.c.bf16 %v709, %v709
      %v774 = vpack.c.bf16 %v710, %v710
      %v775 = vpack.c.bf16 %v711, %v711
      %v776 = vpack.c.bf16 %v712, %v712
      %v777 = vpack.c.bf16 %v713, %v713
      %v778 = vpack.c.bf16 %v714, %v714
      %v779 = vpack.c.bf16 %v715, %v715
      %v780 = vpack.c.bf16 %v716, %v716
      %v781 = vpack.c.bf16 %v717, %v717
      %v782 = vpack.c.bf16 %v718, %v718
      %v783 = vpack.c.bf16 %v719, %v719
      %v784 = vpack.c.bf16 %v720, %v720
      %v785 = vpack.c.bf16 %v721, %v721
      %v786 = vpack.c.bf16 %v722, %v722
      %v787 = vpack.c.bf16 %v723, %v723
      %v788 = vpack.c.bf16 %v724, %v724
      %v789 = vpack.c.bf16 %v725, %v725
      %v790 = vpack.c.bf16 %v726, %v726
      %v791 = vpack.c.bf16 %v727, %v727
      %v792 = vpack.c.bf16 %v728, %v728
      %v793 = vpack.c.bf16 %v729, %v729
      %v794 = vpack.c.bf16 %v730, %v730
      %v795 = vpack.c.bf16 %v731, %v731
      %v796 = vpack.c.bf16 %v732, %v732
      %v797 = vpack.c.bf16 %v733, %v733
      %v798 = vpack.c.bf16 %v734, %v734
      %v799 = vpack.c.bf16 %v735, %v735
      %v800 = vpack.c.bf16 %v736, %v736
      %v801 = vpack.c.bf16 %v737, %v737
      %v802 = vpack.c.bf16 %v738, %v738
      %v803 = vpack.c.bf16 %v739, %v739
      %v804 = vpack.c.bf16 %v740, %v740
      %v805 = vpack.c.bf16 %v741, %v741
      %v806 = vpack.c.bf16 %v742, %v742
      %v807 = vpack.c.bf16 %v743, %v743
      %v808 = vpack.c.bf16 %v744, %v744
      %v809 = vpack.c.bf16 %v745, %v745
      %v810 = vpack.c.bf16 %v746, %v746
      %v811 = vpack.c.bf16 %v747, %v747
      %v812 = vpack.c.bf16 %v748, %v748
      %v813 = vpack.c.bf16 %v749, %v749
      %v814 = vpack.c.bf16 %v750, %v750
      %v815 = vpack.c.bf16 %v751, %v751
      %v816 = vpack.c.bf16 %v752, %v752
      %v817 = vpack.c.bf16 %v753, %v753
      %v818 = vpack.c.bf16 %v754, %v754
      %vm819 = vcmask 125952
      %820 = vst.msk [vmem:[%s172] sm:$0xf] %vm819, %v755
      %821 = vst.msk [vmem:[%s172 + $0x4] sm:$0xf] %vm819, %v756
      %822 = vst.msk [vmem:[%s172 + $0x8] sm:$0xf] %vm819, %v757
      %823 = vst.msk [vmem:[%s172 + $0xc] sm:$0xf] %vm819, %v758
      %824 = vst.msk [vmem:[%s172 + $0x10] sm:$0xf] %vm819, %v759
      %825 = vst.msk [vmem:[%s172 + $0x14] sm:$0xf] %vm819, %v760
      %826 = vst.msk [vmem:[%s172 + $0x18] sm:$0xf] %vm819, %v761
      %827 = vst.msk [vmem:[%s172 + $0x1c] sm:$0xf] %vm819, %v762
      %828 = vst.msk [vmem:[%s172 + $0x20] sm:$0xf] %vm819, %v763
      %829 = vst.msk [vmem:[%s172 + $0x24] sm:$0xf] %vm819, %v764
      %830 = vst.msk [vmem:[%s172 + $0x28] sm:$0xf] %vm819, %v765
      %831 = vst.msk [vmem:[%s172 + $0x2c] sm:$0xf] %vm819, %v766
      %832 = vst.msk [vmem:[%s172 + $0x30] sm:$0xf] %vm819, %v767
      %833 = vst.msk [vmem:[%s172 + $0x34] sm:$0xf] %vm819, %v768
      %834 = vst.msk [vmem:[%s172 + $0x38] sm:$0xf] %vm819, %v769
      %835 = vst.msk [vmem:[%s172 + $0x3c] sm:$0xf] %vm819, %v770
      %836 = vst.msk [vmem:[%s172 + $0x40] sm:$0xf] %vm819, %v771
      %837 = vst.msk [vmem:[%s172 + $0x44] sm:$0xf] %vm819, %v772
      %838 = vst.msk [vmem:[%s172 + $0x48] sm:$0xf] %vm819, %v773
      %839 = vst.msk [vmem:[%s172 + $0x4c] sm:$0xf] %vm819, %v774
      %840 = vst.msk [vmem:[%s172 + $0x50] sm:$0xf] %vm819, %v775
      %841 = vst.msk [vmem:[%s172 + $0x54] sm:$0xf] %vm819, %v776
      %842 = vst.msk [vmem:[%s172 + $0x58] sm:$0xf] %vm819, %v777
      %843 = vst.msk [vmem:[%s172 + $0x5c] sm:$0xf] %vm819, %v778
      %844 = vst.msk [vmem:[%s172 + $0x60] sm:$0xf] %vm819, %v779
      %845 = vst.msk [vmem:[%s172 + $0x64] sm:$0xf] %vm819, %v780
      %846 = vst.msk [vmem:[%s172 + $0x68] sm:$0xf] %vm819, %v781
      %847 = vst.msk [vmem:[%s172 + $0x6c] sm:$0xf] %vm819, %v782
      %848 = vst.msk [vmem:[%s172 + $0x70] sm:$0xf] %vm819, %v783
      %849 = vst.msk [vmem:[%s172 + $0x74] sm:$0xf] %vm819, %v784
      %850 = vst.msk [vmem:[%s172 + $0x78] sm:$0xf] %vm819, %v785
      %851 = vst.msk [vmem:[%s172 + $0x7c] sm:$0xf] %vm819, %v786
      %852 = vst.msk [vmem:[%s172 + $0x80] sm:$0xf] %vm819, %v787
      %853 = vst.msk [vmem:[%s172 + $0x84] sm:$0xf] %vm819, %v788
      %854 = vst.msk [vmem:[%s172 + $0x88] sm:$0xf] %vm819, %v789
      %855 = vst.msk [vmem:[%s172 + $0x8c] sm:$0xf] %vm819, %v790
      %856 = vst.msk [vmem:[%s172 + $0x90] sm:$0xf] %vm819, %v791
      %857 = vst.msk [vmem:[%s172 + $0x94] sm:$0xf] %vm819, %v792
      %858 = vst.msk [vmem:[%s172 + $0x98] sm:$0xf] %vm819, %v793
      %859 = vst.msk [vmem:[%s172 + $0x9c] sm:$0xf] %vm819, %v794
      %860 = vst.msk [vmem:[%s172 + $0xa0] sm:$0xf] %vm819, %v795
      %861 = vst.msk [vmem:[%s172 + $0xa4] sm:$0xf] %vm819, %v796
      %862 = vst.msk [vmem:[%s172 + $0xa8] sm:$0xf] %vm819, %v797
      %863 = vst.msk [vmem:[%s172 + $0xac] sm:$0xf] %vm819, %v798
      %864 = vst.msk [vmem:[%s172 + $0xb0] sm:$0xf] %vm819, %v799
      %865 = vst.msk [vmem:[%s172 + $0xb4] sm:$0xf] %vm819, %v800
      %866 = vst.msk [vmem:[%s172 + $0xb8] sm:$0xf] %vm819, %v801
      %867 = vst.msk [vmem:[%s172 + $0xbc] sm:$0xf] %vm819, %v802
      %868 = vst.msk [vmem:[%s172 + $0xc0] sm:$0xf] %vm819, %v803
      %869 = vst.msk [vmem:[%s172 + $0xc4] sm:$0xf] %vm819, %v804
      %870 = vst.msk [vmem:[%s172 + $0xc8] sm:$0xf] %vm819, %v805
      %871 = vst.msk [vmem:[%s172 + $0xcc] sm:$0xf] %vm819, %v806
      %872 = vst.msk [vmem:[%s172 + $0xd0] sm:$0xf] %vm819, %v807
      %873 = vst.msk [vmem:[%s172 + $0xd4] sm:$0xf] %vm819, %v808
      %874 = vst.msk [vmem:[%s172 + $0xd8] sm:$0xf] %vm819, %v809
      %875 = vst.msk [vmem:[%s172 + $0xdc] sm:$0xf] %vm819, %v810
      %876 = vst.msk [vmem:[%s172 + $0xe0] sm:$0xf] %vm819, %v811
      %877 = vst.msk [vmem:[%s172 + $0xe4] sm:$0xf] %vm819, %v812
      %878 = vst.msk [vmem:[%s172 + $0xe8] sm:$0xf] %vm819, %v813
      %879 = vst.msk [vmem:[%s172 + $0xec] sm:$0xf] %vm819, %v814
      %880 = vst.msk [vmem:[%s172 + $0xf0] sm:$0xf] %vm819, %v815
      %881 = vst.msk [vmem:[%s172 + $0xf4] sm:$0xf] %vm819, %v816
      %882 = vst.msk [vmem:[%s172 + $0xf8] sm:$0xf] %vm819, %v817
      %883 = vst.msk [vmem:[%s172 + $0xfc] sm:$0xf] %vm819, %v818
      %s884 = smul.u32 64, %s14
      %p885 = scmp.lt.s32.totalorder %s884, 255
      %s886 = scalar_select %p885, %s884, 255
      %s887 = smul.addr %s886, 4
      %s888 = scalar_lea.vmem %s3, %s887
      // Predicated region
      $region33: #{matmul_bias_act.1} parent=31 // pred_check
        %p889 = pneg %p100
      $region34: #{matmul_bias_act.1} parent=31 // pred_check_branch
        %891 = sbr.rel (%p889) target = $region36
      $region35: #{matmul_bias_act.1} parent=31 // pred_region
        %s892 = smul.u32 64, %s14
      $region36: #{matmul_bias_act.1} parent=31 // pred_fallthru
        _
    $region32: #{matmul_bias_act.1} parent=5 // pred_fallthru
      _
    %p893 = scmp.le.s32.totalorder 2, %s9
    // Predicated region
    $region37: #{matmul_bias_act.1} parent=5 // pred_check
      %p894 = pneg %p893
    $region38: #{matmul_bias_act.1} parent=5 // pred_check_branch
      %896 = sbr.rel (%p894) target = $region40
    $region39: #{matmul_bias_act.1} parent=5 // pred_region
      %s897 = ssub.s32 %s9, 2
      // Predicated region
      $region41: #{matmul_bias_act.1} parent=39 // pred_check
        %p898 = pneg %p106
      $region42: #{matmul_bias_act.1} parent=39 // pred_check_branch
        %900 = sbr.rel (%p898) target = $region44
      $region43: #{matmul_bias_act.1} parent=39 // pred_region
        %s901 = smul.u32 64, %s15
        %p902 = scmp.lt.s32.totalorder %s901, 255
        %s903 = scalar_select %p902, %s901, 255
        %s904 = smul.addr %s903, 4
        %s905 = scalar_lea.vmem %s3, %s904
      $region44: #{matmul_bias_act.1} parent=39 // pred_fallthru
        _
    $region40: #{matmul_bias_act.1} parent=5 // pred_fallthru
      _
  $region6: #{matmul_bias_act.1} parent=0 // loop_footer
    %s13 = sadd.s32 1, %s9
  $region7: #{matmul_bias_act.1} parent=0 // loop_footer_branch
    %8 = sbr.rel target = $region3
  $region8: #{matmul_bias_act.1} parent=0 // loop_exit
    _

</llo_original>
